<compile_context>
chip_gen: v5e
topology: v5e:2x2
jax: 0.10.0
libtpu: 0.0.40
codegen_flags: <defaults>
</compile_context>

<pallas_src>
import jax
import jax.numpy as jnp
from jax.experimental import pallas as pl
from jax.experimental.pallas import tpu as pltpu


def _round_up(x, m):
    return ((x + m - 1) // m) * m


def _vmem_capacity_bytes():
    try:
        return int(pltpu.get_tpu_info().vmem_capacity_bytes)
    except Exception:
        return 64 << 20  # conservative: v7x per-TensorCore VMEM


# --------------------------------------------------------------------------
# Kernels
# --------------------------------------------------------------------------

def ffn_kernel_resident(x_ref, w1_ref, b1_ref, w2_ref, b2_ref, o_ref):
    """Fast path: both weight matrices resident in VMEM, grid = (row_tiles,)."""
    # fc1: (tm, d_model) @ (d_model, d_ff) -> f32
    h = jnp.dot(x_ref[...], w1_ref[...], preferred_element_type=jnp.float32)
    h = jnp.maximum(h + b1_ref[...].astype(jnp.float32), 0.0)
    # fc2: (tm, d_ff) @ (d_ff, d_model) -> f32, straight to the output tile.
    y = jnp.dot(h.astype(w2_ref.dtype), w2_ref[...],
                preferred_element_type=jnp.float32)
    o_ref[...] = (y + b2_ref[...].astype(jnp.float32)).astype(o_ref.dtype)


def ffn_kernel_ktiled(x_ref, w1_ref, b1_ref, w2_ref, b2_ref, o_ref, acc_ref):
    """Streamed-weight path: d_ff tiled on the trailing reduction grid axis."""
    k = pl.program_id(1)

    @pl.when(k == 0)
    def _():
        acc_ref[...] = jnp.zeros_like(acc_ref)

    # fc1 slice: (tm, d_model) @ (d_model, tk) -> (tm, tk), f32 accumulation.
    h = jnp.dot(x_ref[...], w1_ref[...], preferred_element_type=jnp.float32)
    h = jnp.maximum(h + b1_ref[...].astype(jnp.float32), 0.0)
    # partial fc2: (tm, tk) @ (tk, d_model), accumulated in f32 scratch.
    acc_ref[...] += jnp.dot(h.astype(w2_ref.dtype), w2_ref[...],
                            preferred_element_type=jnp.float32)

    @pl.when(k == pl.num_programs(1) - 1)
    def _():
        o_ref[...] = (acc_ref[...] + b2_ref[...].astype(jnp.float32)
                      ).astype(o_ref.dtype)


# --------------------------------------------------------------------------
# Wrapper
# --------------------------------------------------------------------------

def _choose_tk(d_ff, d_model, w_bytes, weight_budget):
    """Return the d_ff tile.  == d_ff means fully resident weights."""
    if 2 * d_model * d_ff * w_bytes <= weight_budget:
        return d_ff
    # Streamed path: 256-multiples match v6e/v7x 256x256 MXUs (and are legal
    # 128-multiples on v5e).  Largest tile whose double-buffered w1+w2 slices
    # stay within the weight budget.
    for cand in (2048, 1024, 512, 256, 128):
        if cand <= d_ff and 2 * 2 * d_model * cand * w_bytes <= weight_budget:
            return cand
    return 128


def position_feedforward(x, w1, b1, w2, b2, *, tm=None, tk=None,
                         weight_vmem_budget=None):
    """x: (B, S, d_model); w1: (d_model, d_ff); b1: (1, d_ff);
       w2: (d_ff, d_model); b2: (1, d_model).  Returns (B, S, d_model)."""
    B, S, d_model = x.shape
    d_ff = w1.shape[1]
    rows = B * S
    out_dtype = x.dtype

    b1 = b1.reshape(1, -1)
    b2 = b2.reshape(1, -1)

    # MXU operands run in the weight dtype; cast x ONCE on the host.
    compute_dtype = w1.dtype
    x2 = x.reshape(rows, d_model)
    if x2.dtype != compute_dtype:
        x2 = x2.astype(compute_dtype)

    x_bytes = jnp.dtype(compute_dtype).itemsize
    w_bytes = jnp.dtype(w1.dtype).itemsize
    o_bytes = jnp.dtype(out_dtype).itemsize

    # ---- generation-aware VMEM budgets -----------------------------------
    vmem_cap = _vmem_capacity_bytes()
    scoped_cap = int(0.75 * vmem_cap)              # leave headroom for Mosaic
    if weight_vmem_budget is None:
        # 128 MiB chips (v5e/v6e): keep weights resident up to ~64 MiB.
        # 64 MiB v7x: stream earlier (16 MiB budget).
        weight_vmem_budget = (64 << 20) if vmem_cap >= (96 << 20) else (16 << 20)

    # ---- d_ff tiling ------------------------------------------------------
    if tk is None:
        tk = _choose_tk(d_ff, d_model, w_bytes, weight_vmem_budget)
    else:
        tk = int(tk)
        tk = d_ff if tk >= d_ff else _round_up(max(tk, 128), 128)

    if tk >= d_ff:
        tk = d_ff
        d_ff_pad = d_ff
        k_steps = 1
    else:
        # Zero-pad d_ff to a tile multiple: padded hidden columns are exactly
        # zero after ReLU and the matching w2 rows are zero, so it is exact.
        d_ff_pad = _round_up(d_ff, tk)
        k_steps = d_ff_pad // tk
        if d_ff_pad != d_ff:
            pad = d_ff_pad - d_ff
            w1 = jnp.pad(w1, ((0, 0), (0, pad)))
            b1 = jnp.pad(b1, ((0, 0), (0, pad)))
            w2 = jnp.pad(w2, ((0, pad), (0, 0)))

    # ---- row tiling -------------------------------------------------------
    sub = 16 if compute_dtype == jnp.bfloat16 else 8
    if tm is None:
        # Resident weights: x/out streaming dominates, 256 rows is plenty.
        # Streamed weights: AI ~ tm FLOP/byte; need >= ~640 for v6e's ridge.
        tm = 256 if k_steps == 1 else 1024
    tm = _round_up(max(int(tm), sub), sub)
    # Guarantee at least 2 row tiles so v7x's two TensorCores both get work
    # (row axis is "parallel") and x/out tiles pipeline behind the matmuls.
    tm_cap = max(sub, _round_up(-(-rows // 2), sub))
    tm = min(tm, tm_cap)

    # ---- specs / grid -----------------------------------------------------
    res_mode = pl.Buffered(1)  # constant-index blocks: no double buffering
    if k_steps == 1:
        grid = (pl.cdiv(rows, tm),)
        in_specs = [
            pl.BlockSpec((tm, d_model), lambda i: (i, 0)),                            # x
            pl.BlockSpec((d_model, d_ff_pad), lambda i: (0, 0), pipeline_mode=res_mode),  # w1
            pl.BlockSpec((1, d_ff_pad), lambda i: (0, 0), pipeline_mode=res_mode),    # b1
            pl.BlockSpec((d_ff_pad, d_model), lambda i: (0, 0), pipeline_mode=res_mode),  # w2
            pl.BlockSpec((1, d_model), lambda i: (0, 0), pipeline_mode=res_mode),     # b2
        ]
        out_spec = pl.BlockSpec((tm, d_model), lambda i: (i, 0))
        kernel = ffn_kernel_resident
        scratch = []
        dims = ("parallel",)
        w_buf = 1
    else:
        grid = (pl.cdiv(rows, tm), k_steps)
        # A third weight buffer only pays once the per-step matmul is
        # compute-bound (large tm); otherwise it just eats VMEM.
        w_buf = 3 if tm >= 512 else 2
        w_mode = pl.Buffered(w_buf)
        in_specs = [
            pl.BlockSpec((tm, d_model), lambda i, k: (i, 0)),                         # x
            pl.BlockSpec((d_model, tk), lambda i, k: (0, k), pipeline_mode=w_mode),   # w1
            pl.BlockSpec((1, tk), lambda i, k: (0, k), pipeline_mode=w_mode),         # b1
            pl.BlockSpec((tk, d_model), lambda i, k: (k, 0), pipeline_mode=w_mode),   # w2
            pl.BlockSpec((1, d_model), lambda i, k: (0, 0), pipeline_mode=res_mode),  # b2
        ]
        out_spec = pl.BlockSpec((tm, d_model), lambda i, k: (i, 0))
        kernel = ffn_kernel_ktiled
        scratch = [pltpu.VMEM((tm, d_model), jnp.float32)]
        dims = ("parallel", "arbitrary")

    # ---- scoped VMEM limit sized from the working set ---------------------
    est = (w_buf * (d_model * tk + tk * d_model + tk) * w_bytes   # w1/b1/w2 buffers
           + d_model * w_bytes                                    # b2
           + 2 * tm * d_model * x_bytes                           # x tiles
           + 2 * tm * d_model * o_bytes                           # out tiles
           + (0 if k_steps == 1 else tm * d_model * 4)            # f32 accumulator
           + tm * tk * 4)                                         # live hidden slice
    vmem_limit = int(min(max(int(1.5 * est), 32 << 20), scoped_cap))

    out2 = pl.pallas_call(
        kernel,
        out_shape=jax.ShapeDtypeStruct((rows, d_model), out_dtype),
        grid_spec=pltpu.PrefetchScalarGridSpec(
            num_scalar_prefetch=0,
            grid=grid,
            in_specs=in_specs,
            out_specs=out_spec,
            scratch_shapes=scratch,
        ),
        compiler_params=pltpu.CompilerParams(
            dimension_semantics=dims,
            vmem_limit_bytes=vmem_limit,
        ),
    )(x2, w1, b1, w2, b2)
    return out2.reshape(B, S, d_model)


def init_params(key, d_model, d_ff, dtype=jnp.float32):
    # Mirror nn.Linear default init: U(-1/sqrt(fan_in), 1/sqrt(fan_in)).
    k1, k2, k3, k4 = jax.random.split(key, 4)
    bound1 = 1.0 / (d_model ** 0.5)
    bound2 = 1.0 / (d_ff ** 0.5)
    # weights stored pre-transposed: (in, out) so the kernel computes x @ w
    w1 = jax.random.uniform(k1, (d_model, d_ff), dtype, -bound1, bound1)
    b1 = jax.random.uniform(k2, (1, d_ff), dtype, -bound1, bound1)
    w2 = jax.random.uniform(k3, (d_ff, d_model), dtype, -bound2, bound2)
    b2 = jax.random.uniform(k4, (1, d_model), dtype, -bound2, bound2)
    return w1, b1, w2, b2


if __name__ == "__main__":
    key = jax.random.PRNGKey(0)
    kx, kp = jax.random.split(key)

    # Small but lane-dense dims (multiples of 128 on the feature axes).
    B, S, d_model, d_ff = 2, 128, 128, 256
    x = jax.random.normal(kx, (B, S, d_model), jnp.float32)
    w1, b1, w2, b2 = init_params(kp, d_model, d_ff, jnp.float32)
    ref = jnp.maximum(x @ w1 + b1[0], 0.0) @ w2 + b2[0]

    # 1) resident fast path: single grid axis, no accumulator scratch.
    out = position_feedforward(x, w1, b1, w2, b2)
    jax.block_until_ready(out)
    assert out.shape == (B, S, d_model)
    assert jnp.allclose(out, ref, atol=1e-4, rtol=1e-4)

    # 2) forced K-tiled streamed path: 2 reduction steps with f32 accumulator.
    out_k = position_feedforward(x, w1, b1, w2, b2, tk=128)
    jax.block_until_ready(out_k)
    assert jnp.allclose(out_k, ref, atol=1e-4, rtol=1e-4)

    # 3) odd d_ff on the streamed path: zero-padded to a tile multiple (exact).
    d_ff_odd = 192
    w1o, b1o, w2o, b2o = init_params(kp, d_model, d_ff_odd, jnp.float32)
    ref_o = jnp.maximum(x @ w1o + b1o[0], 0.0) @ w2o + b2o[0]
    out_o = position_feedforward(x, w1o, b1o, w2o, b2o, tk=128)
    jax.block_until_ready(out_o)
    assert jnp.allclose(out_o, ref_o, atol=1e-4, rtol=1e-4)

    # 4) bf16 weights with f32 activations: x cast once on the host, MXU runs
    #    bf16, bias/ReLU/accumulation/output stay f32.
    w1b, b1b, w2b, b2b = (p.astype(jnp.bfloat16) for p in (w1, b1, w2, b2))
    out_bf = position_feedforward(x, w1b, b1b, w2b, b2b)
    jax.block_until_ready(out_bf)
    xb = x.astype(jnp.bfloat16).astype(jnp.float32)
    ref_bf = (jnp.maximum(xb @ w1b.astype(jnp.float32)
                          + b1b[0].astype(jnp.float32), 0.0)
              @ w2b.astype(jnp.float32) + b2b[0].astype(jnp.float32))
    assert out_bf.dtype == x.dtype
    assert jnp.allclose(out_bf, ref_bf, atol=5e-2, rtol=5e-2)

    print("KERNEL_OK")
</pallas_src>

<mosaic_0001>
module attributes {stable_mosaic.version = 11 : i64} {
  func.func @ffn_kernel_resident(%arg0: i32, %arg1: memref<128x128xf32, #tpu.memory_space<vmem>>, %arg2: memref<128x256xf32, #tpu.memory_space<vmem>>, %arg3: memref<1x256xf32, #tpu.memory_space<vmem>>, %arg4: memref<256x128xf32, #tpu.memory_space<vmem>>, %arg5: memref<1x128xf32, #tpu.memory_space<vmem>>, %arg6: memref<128x128xf32, #tpu.memory_space<vmem>>) attributes {dimension_semantics = [#tpu.dimension_semantics<parallel>], iteration_bounds = array<i64: 2>, scalar_prefetch = 0 : i64, scratch_operands = 0 : i64, tpu.core_type = #tpu.core_type<tc>, window_params = [{transform_indices = @transform_0, window_bounds = array<i64: 128, 128>}, {pipeline_mode = #tpu.pipeline_mode<synchronous>, transform_indices = @transform_1, window_bounds = array<i64: 128, 256>}, {pipeline_mode = #tpu.pipeline_mode<synchronous>, transform_indices = @transform_2, window_bounds = array<i64: 1, 256>}, {pipeline_mode = #tpu.pipeline_mode<synchronous>, transform_indices = @transform_3, window_bounds = array<i64: 256, 128>}, {pipeline_mode = #tpu.pipeline_mode<synchronous>, transform_indices = @transform_4, window_bounds = array<i64: 1, 128>}, {transform_indices = @transform_5, window_bounds = array<i64: 128, 128>}]} {
    %c0 = arith.constant 0 : index
    %c0_0 = arith.constant 0 : index
    %0 = vector.load %arg1[%c0, %c0_0] : memref<128x128xf32, #tpu.memory_space<vmem>>, vector<128x128xf32>
    %c0_1 = arith.constant 0 : index
    %c0_2 = arith.constant 0 : index
    %1 = vector.load %arg2[%c0_1, %c0_2] : memref<128x256xf32, #tpu.memory_space<vmem>>, vector<128x256xf32>
    %cst = arith.constant dense<0.000000e+00> : vector<128x256xf32>
    %2 = tpu.matmul %0, %1, %cst {dimension_numbers = #tpu.dot_dimension_numbers<[1], [0], [0], [1], [0, 0, 1, 1], [], []>} : vector<128x128xf32>, vector<128x256xf32>, vector<128x256xf32> -> vector<128x256xf32>
    %c0_3 = arith.constant 0 : index
    %c0_4 = arith.constant 0 : index
    %3 = vector.load %arg3[%c0_3, %c0_4] : memref<1x256xf32, #tpu.memory_space<vmem>>, vector<1x256xf32>
    %4 = vector.broadcast %3 : vector<1x256xf32> to vector<128x256xf32>
    %5 = arith.addf %2, %4 : vector<128x256xf32>
    %cst_5 = arith.constant 0.000000e+00 : f32
    %6 = vector.broadcast %cst_5 : f32 to vector<128x256xf32>
    %7 = arith.maximumf %5, %6 : vector<128x256xf32>
    %c0_6 = arith.constant 0 : index
    %c0_7 = arith.constant 0 : index
    %8 = vector.load %arg4[%c0_6, %c0_7] : memref<256x128xf32, #tpu.memory_space<vmem>>, vector<256x128xf32>
    %cst_8 = arith.constant dense<0.000000e+00> : vector<128x128xf32>
    %9 = tpu.matmul %7, %8, %cst_8 {dimension_numbers = #tpu.dot_dimension_numbers<[1], [0], [0], [1], [0, 0, 1, 1], [], []>} : vector<128x256xf32>, vector<256x128xf32>, vector<128x128xf32> -> vector<128x128xf32>
    %c0_9 = arith.constant 0 : index
    %c0_10 = arith.constant 0 : index
    %10 = vector.load %arg5[%c0_9, %c0_10] : memref<1x128xf32, #tpu.memory_space<vmem>>, vector<1x128xf32>
    %11 = vector.broadcast %10 : vector<1x128xf32> to vector<128x128xf32>
    %12 = arith.addf %9, %11 : vector<128x128xf32>
    %c0_11 = arith.constant 0 : index
    %c0_12 = arith.constant 0 : index
    %13 = vector.load %arg6[%c0_11, %c0_12] : memref<128x128xf32, #tpu.memory_space<vmem>>, vector<128x128xf32>
    tpu.vector_store %arg6[%c0_11, %c0_12], %12 {strides = array<i32>} : memref<128x128xf32, #tpu.memory_space<vmem>>, vector<128x128xf32>,
    return
  }
  func.func @transform_0(%arg0: i32) -> (i32, i32) {
    %c0_i32 = arith.constant 0 : i32
    %c0_i32_0 = arith.constant 0 : i32
    return %arg0, %c0_i32 : i32, i32
  }
  func.func @transform_1(%arg0: i32) -> (i32, i32) {
    %c0_i32 = arith.constant 0 : i32
    %c0_i32_0 = arith.constant 0 : i32
    %c0_i32_1 = arith.constant 0 : i32
    return %c0_i32, %c0_i32_0 : i32, i32
  }
  func.func @transform_2(%arg0: i32) -> (i32, i32) {
    %c0_i32 = arith.constant 0 : i32
    %c0_i32_0 = arith.constant 0 : i32
    %c0_i32_1 = arith.constant 0 : i32
    return %c0_i32, %c0_i32_0 : i32, i32
  }
  func.func @transform_3(%arg0: i32) -> (i32, i32) {
    %c0_i32 = arith.constant 0 : i32
    %c0_i32_0 = arith.constant 0 : i32
    %c0_i32_1 = arith.constant 0 : i32
    return %c0_i32, %c0_i32_0 : i32, i32
  }
  func.func @transform_4(%arg0: i32) -> (i32, i32) {
    %c0_i32 = arith.constant 0 : i32
    %c0_i32_0 = arith.constant 0 : i32
    %c0_i32_1 = arith.constant 0 : i32
    return %c0_i32, %c0_i32_0 : i32, i32
  }
  func.func @transform_5(%arg0: i32) -> (i32, i32) {
    %c0_i32 = arith.constant 0 : i32
    %c0_i32_0 = arith.constant 0 : i32
    return %arg0, %c0_i32 : i32, i32
  }
}

</mosaic_0001>

<llo_original>
// kernel: tpu_custom_call.1
$region0: #{tpu_custom_call.1}
  #allocation0 [shape = 'u32[]', space=smem, size = 0x4, offset = 0x4, fixed_abs, tag = 'smem constant byte address 0x4 - core index']
  #allocation1 [shape = 'u32[72,128]{1,0:T(1,128)}', space=vmem, size = 0x9000, scoped, tag = 'internal scratch']
  %s0 = inlined_call_operand.hbm [shape: f32[256,128], index: 0, kind: input, shape index: {}]
  %s1 = inlined_call_operand.hbm [shape: f32[128,256], index: 1, kind: input, shape index: {}]
  %s2 = inlined_call_operand.hbm [shape: f32[1,256], index: 2, kind: input, shape index: {}]
  %s3 = inlined_call_operand.hbm [shape: f32[256,128], index: 3, kind: input, shape index: {}]
  %s4 = inlined_call_operand.vmem [shape: f32[1,128], index: 4, kind: input, shape index: {}]
  %s5 = inlined_call_operand.hbm [shape: f32[256,128], index: 5, kind: output, shape index: {}]
  %s6 = sld [smem:[#allocation0]]
  $region69: #{tpu_custom_call.1} parent=0
    _
  %s8 = ssub.s32 1, %s6
  %s9 = scalar_select 0, %s8, %s6
  $region1: #{tpu_custom_call.1} parent=0
    #allocation2 [shape = 'u8[131072]{0}', space=vmem, size = 0x20000, scoped, tag = 'input window, operand 0']
    #allocation3 [shape = 's32[2]{0}', space=sflag, size = 0x8, scoped, tag = 'scoped memory for tpu_custom_call.1']
    #allocation4 [shape = 's32[2]{0}', space=sflag, size = 0x8, scoped, tag = 'scoped memory for tpu_custom_call.1']
    #allocation5 [shape = 'u8[131072]{0}', space=vmem, size = 0x20000, scoped, tag = 'input window, operand 1, single buffered']
    #allocation6 [shape = 's32[1]{0}', space=sflag, size = 0x4, scoped, tag = 'scoped memory for tpu_custom_call.1']
    #allocation7 [shape = 'u8[1024]{0}', space=vmem, size = 0x400, scoped, tag = 'input window, operand 2, single buffered']
    #allocation8 [shape = 'u8[131072]{0}', space=vmem, size = 0x20000, scoped, tag = 'input window, operand 3, single buffered']
    #allocation9 [shape = 's32[1]{0}', space=sflag, size = 0x4, scoped, tag = 'scoped memory for tpu_custom_call.1']
    #allocation10 [shape = 'u8[131072]{0}', space=vmem, size = 0x20000, scoped, tag = 'output window, operand 0']
    %10 = vsyncpa [#allocation3], 0
    %s11 = scalar_lea.sflag [#allocation3], 1
    %12 = vsyncpa %s11, 0
    %13 = vsyncpa [#allocation6], 0
    %14 = vsyncpa [#allocation9], 0
    %15 = vsyncpa [#allocation4], 0
    %s16 = scalar_lea.sflag [#allocation4], 1
    %17 = vsyncpa %s16, 0
    loop: start=0, step=1, limit=4
    $region2: #{tpu_custom_call.1} parent=1 // loop_pre_header
      _
    $region3: #{tpu_custom_call.1} parent=1 // loop_header
      %s19 = sphi 0, %s23
      %p20 = scmp.ge.s32.totalorder %s19, 4
      %s29 = sphi 0, %s31
      %s32 = sphi 0, %s29
      %s33 = sphi 0, %s32
      %s49 = sphi 0, %s33
      %s53 = sphi 0, %s53
      %s55 = sphi 0, %s53
      %s56 = sphi 0, %s55
      %s70 = sphi 0, %s56
      %s74 = sphi 0, %s74
      %s76 = sphi 0, %s74
      %s77 = sphi 0, %s76
      %s91 = sphi 0, %s77
      %s95 = sphi 0, %s95
      %s97 = sphi 0, %s95
      %s98 = sphi 0, %s97
      %s112 = sphi 0, %s98
      %s116 = sphi 0, %s116
      %s118 = sphi 0, %s116
      %s119 = sphi 0, %s118
      %s133 = sphi 0, %s119
      %s139 = sphi 0, %s141
      %s142 = sphi 0, %s139
      %s143 = sphi 0, %s142
      %s159 = sphi 0, %s143
    $region4: #{tpu_custom_call.1} parent=1 // loop_header_branch
      %22 = sbr.rel (%p20) target = $region8
    $region5: #{tpu_custom_call.1} parent=1 // loop_body
      %s24 = ssub.s32 %s19, 1
      %s25 = ssub.s32 %s19, 2
      %s26 = sadd.s32 %s19, 1
      %s27 = ssub.s32 %s19, %s26
      %p28 = scmp.eq.s32.totalorder %s27, 0
      %s30 = sadd.s32 %s29, 1
      %s31 = scalar_select %p28, %s29, %s30
      %p34 = pneg %p28
      %p35 = scmp.eq.s32.totalorder %s19, 1
      %p36 = por %p34, %p35
      %p37 = scmp.ne.s32.totalorder %s29, %s32
      %p38 = scmp.eq.s32.totalorder %s19, 0
      %p39 = por %p37, %p38
      %p40 = scmp.ne.s32.totalorder %s29, %s32
      %p41 = scmp.eq.s32.totalorder %s24, 1
      %p42 = por %p40, %p41
      %p43 = scmp.ne.s32.totalorder %s32, %s33
      %p44 = scmp.eq.s32.totalorder %s24, 0
      %p45 = por %p43, %p44
      %p46 = scmp.ne.s32.totalorder %s32, %s33
      %p47 = scmp.eq.s32.totalorder %s25, 1
      %p48 = por %p46, %p47
      %p50 = scmp.ne.s32.totalorder %s33, %s49
      %p51 = scmp.eq.s32.totalorder %s25, 0
      %p52 = por %p50, %p51
      %s54 = sadd.s32 %s53, 1
      %p57 = scmp.eq.s32.totalorder %s19, 1
      %p58 = scmp.ne.s32.totalorder %s53, %s55
      %p59 = scmp.eq.s32.totalorder %s19, 0
      %p60 = por %p58, %p59
      %p61 = scmp.ne.s32.totalorder %s53, %s55
      %p62 = scmp.eq.s32.totalorder %s24, 1
      %p63 = por %p61, %p62
      %p64 = scmp.ne.s32.totalorder %s55, %s56
      %p65 = scmp.eq.s32.totalorder %s24, 0
      %p66 = por %p64, %p65
      %p67 = scmp.ne.s32.totalorder %s55, %s56
      %p68 = scmp.eq.s32.totalorder %s25, 1
      %p69 = por %p67, %p68
      %p71 = scmp.ne.s32.totalorder %s56, %s70
      %p72 = scmp.eq.s32.totalorder %s25, 0
      %p73 = por %p71, %p72
      %s75 = sadd.s32 %s74, 1
      %p78 = scmp.eq.s32.totalorder %s19, 1
      %p79 = scmp.ne.s32.totalorder %s74, %s76
      %p80 = scmp.eq.s32.totalorder %s19, 0
      %p81 = por %p79, %p80
      %p82 = scmp.ne.s32.totalorder %s74, %s76
      %p83 = scmp.eq.s32.totalorder %s24, 1
      %p84 = por %p82, %p83
      %p85 = scmp.ne.s32.totalorder %s76, %s77
      %p86 = scmp.eq.s32.totalorder %s24, 0
      %p87 = por %p85, %p86
      %p88 = scmp.ne.s32.totalorder %s76, %s77
      %p89 = scmp.eq.s32.totalorder %s25, 1
      %p90 = por %p88, %p89
      %p92 = scmp.ne.s32.totalorder %s77, %s91
      %p93 = scmp.eq.s32.totalorder %s25, 0
      %p94 = por %p92, %p93
      %s96 = sadd.s32 %s95, 1
      %p99 = scmp.eq.s32.totalorder %s19, 1
      %p100 = scmp.ne.s32.totalorder %s95, %s97
      %p101 = scmp.eq.s32.totalorder %s19, 0
      %p102 = por %p100, %p101
      %p103 = scmp.ne.s32.totalorder %s95, %s97
      %p104 = scmp.eq.s32.totalorder %s24, 1
      %p105 = por %p103, %p104
      %p106 = scmp.ne.s32.totalorder %s97, %s98
      %p107 = scmp.eq.s32.totalorder %s24, 0
      %p108 = por %p106, %p107
      %p109 = scmp.ne.s32.totalorder %s97, %s98
      %p110 = scmp.eq.s32.totalorder %s25, 1
      %p111 = por %p109, %p110
      %p113 = scmp.ne.s32.totalorder %s98, %s112
      %p114 = scmp.eq.s32.totalorder %s25, 0
      %p115 = por %p113, %p114
      %s117 = sadd.s32 %s116, 1
      %p120 = scmp.eq.s32.totalorder %s19, 1
      %p121 = scmp.ne.s32.totalorder %s116, %s118
      %p122 = scmp.eq.s32.totalorder %s19, 0
      %p123 = por %p121, %p122
      %p124 = scmp.ne.s32.totalorder %s116, %s118
      %p125 = scmp.eq.s32.totalorder %s24, 1
      %p126 = por %p124, %p125
      %p127 = scmp.ne.s32.totalorder %s118, %s119
      %p128 = scmp.eq.s32.totalorder %s24, 0
      %p129 = por %p127, %p128
      %p130 = scmp.ne.s32.totalorder %s118, %s119
      %p131 = scmp.eq.s32.totalorder %s25, 1
      %p132 = por %p130, %p131
      %p134 = scmp.ne.s32.totalorder %s119, %s133
      %p135 = scmp.eq.s32.totalorder %s25, 0
      %p136 = por %p134, %p135
      %s137 = ssub.s32 %s19, %s26
      %p138 = scmp.eq.s32.totalorder %s137, 0
      %s140 = sadd.s32 %s139, 1
      %s141 = scalar_select %p138, %s139, %s140
      %p144 = pneg %p138
      %p145 = scmp.eq.s32.totalorder %s19, 1
      %p146 = por %p144, %p145
      %p147 = scmp.ne.s32.totalorder %s139, %s142
      %p148 = scmp.eq.s32.totalorder %s19, 0
      %p149 = por %p147, %p148
      %p150 = scmp.ne.s32.totalorder %s139, %s142
      %p151 = scmp.eq.s32.totalorder %s24, 1
      %p152 = por %p150, %p151
      %p153 = scmp.ne.s32.totalorder %s142, %s143
      %p154 = scmp.eq.s32.totalorder %s24, 0
      %p155 = por %p153, %p154
      %p156 = scmp.ne.s32.totalorder %s142, %s143
      %p157 = scmp.eq.s32.totalorder %s25, 1
      %p158 = por %p156, %p157
      %p160 = scmp.ne.s32.totalorder %s143, %s159
      %p161 = scmp.eq.s32.totalorder %s25, 0
      %p162 = por %p160, %p161
      %p163 = scmp.le.s32.totalorder 1, %s19
      %p164 = scmp.lt.s32.totalorder %s19, 3
      %p165 = pnand %p163, %p164
      %p166 = pneg %p165
      // Predicated region
      $region9: #{tpu_custom_call.1} parent=5 // pred_check
        _
      $region10: #{tpu_custom_call.1} parent=5 // pred_check_branch
        %168 = sbr.rel (%p165) target = $region12
      $region11: #{tpu_custom_call.1} parent=5 // pred_region
        %s169 = ssub.s32 %s19, 1
        // Predicated region
        $region13: #{tpu_custom_call.1} parent=11 // pred_check
          %p170 = pneg %p66
        $region14: #{tpu_custom_call.1} parent=11 // pred_check_branch
          %172 = sbr.rel (%p170) target = $region16
        $region15: #{tpu_custom_call.1} parent=11 // pred_region
          %174 = vsyncadd [#allocation6], 0
          %s175 = sshll.u32 %s1, 4
          %s176 = int_to_ptr.hbm [resolvable:$true] %s175
          %s177 = sshll.u32 [#allocation5], 4
          %s178 = int_to_ptr.vmem [resolvable:$true] %s177
          %183 = dma.hbm_to_vmem [thread:$0]  %s176, 4096, %s178, [#allocation6], 256, 256, 16
        $region16: #{tpu_custom_call.1} parent=11 // pred_fallthru
          _
        // Predicated region
        $region17: #{tpu_custom_call.1} parent=11 // pred_check
          %p184 = pneg %p87
        $region18: #{tpu_custom_call.1} parent=11 // pred_check_branch
          %186 = sbr.rel (%p184) target = $region20
        $region19: #{tpu_custom_call.1} parent=11 // pred_region
          %188 = vsyncadd [#allocation6], 0
          %s190 = sshll.u32 %s2, 4
          %s191 = int_to_ptr.hbm [resolvable:$true] %s190
          %s192 = sshll.u32 [#allocation7], 4
          %s193 = int_to_ptr.vmem [resolvable:$true] %s192
          %195 = dma.hbm_to_vmem [thread:$0]  %s191, 32, %s193, [#allocation6]
        $region20: #{tpu_custom_call.1} parent=11 // pred_fallthru
          _
        // Predicated region
        $region21: #{tpu_custom_call.1} parent=11 // pred_check
          %p196 = pneg %p108
        $region22: #{tpu_custom_call.1} parent=11 // pred_check_branch
          %198 = sbr.rel (%p196) target = $region24
        $region23: #{tpu_custom_call.1} parent=11 // pred_region
          %200 = vsyncadd [#allocation9], 0
          %s201 = sshll.u32 %s3, 4
          %s202 = int_to_ptr.hbm [resolvable:$true] %s201
          %s203 = sshll.u32 [#allocation8], 4
          %s204 = int_to_ptr.vmem [resolvable:$true] %s203
          %209 = dma.hbm_to_vmem [thread:$0]  %s202, 4096, %s204, [#allocation9], 128, 128, 8
        $region24: #{tpu_custom_call.1} parent=11 // pred_fallthru
          _
        // Predicated region
        $region25: #{tpu_custom_call.1} parent=11 // pred_check
          %p210 = pneg %p129
        $region26: #{tpu_custom_call.1} parent=11 // pred_check_branch
          %212 = sbr.rel (%p210) target = $region28
        $region27: #{tpu_custom_call.1} parent=11 // pred_region
          _
        $region28: #{tpu_custom_call.1} parent=11 // pred_fallthru
          _
      $region12: #{tpu_custom_call.1} parent=5 // pred_fallthru
        _
      %p213 = scmp.lt.s32.totalorder %s19, 2
      // Predicated region
      $region29: #{tpu_custom_call.1} parent=5 // pred_check
        %p214 = pneg %p213
      $region30: #{tpu_custom_call.1} parent=5 // pred_check_branch
        %216 = sbr.rel (%p214) target = $region32
      $region31: #{tpu_custom_call.1} parent=5 // pred_region
        // Predicated region
        $region33: #{tpu_custom_call.1} parent=31 // pred_check
          %p217 = pneg %p39
        $region34: #{tpu_custom_call.1} parent=31 // pred_check_branch
          %219 = sbr.rel (%p217) target = $region36
        $region35: #{tpu_custom_call.1} parent=31 // pred_region
          %s220 = sand.u32 %s29, 1
          %s221 = scalar_lea.sflag [#allocation3], %s220
          %s222 = sand.u32 %s29, 1
          %s223 = smul.addr %s222, 128
          %s224 = scalar_lea.vmem [#allocation2], %s223
          %s225 = smul.u32 16, %s19
          %227 = vsyncadd %s221, 0
          %s228 = smul.addr %s225, 8
          %s229 = scalar_lea.hbm %s0, %s228
          %s230 = sshll.u32 %s229, 4
          %s231 = int_to_ptr.hbm [resolvable:$true] %s230
          %s232 = sshll.u32 %s224, 4
          %s233 = int_to_ptr.vmem [resolvable:$true] %s232
          %238 = dma.hbm_to_vmem [thread:$0]  %s231, 2048, %s233, %s221, 128, 128, 8
        $region36: #{tpu_custom_call.1} parent=31 // pred_fallthru
          _
      $region32: #{tpu_custom_call.1} parent=5 // pred_fallthru
        _
      %p239 = scmp.le.s32.totalorder 1, %s19
      %p240 = scmp.lt.s32.totalorder %s19, 3
      %p241 = pnand %p239, %p240
      %p242 = pneg %p241
      // Predicated region
      $region37: #{tpu_custom_call.1} parent=5 // pred_check
        _
      $region38: #{tpu_custom_call.1} parent=5 // pred_check_branch
        %244 = sbr.rel (%p241) target = $region40
      $region39: #{tpu_custom_call.1} parent=5 // pred_region
        %s245 = ssub.s32 %s19, 1
        %s246 = sand.u32 %s32, 1
        %s247 = scalar_lea.sflag [#allocation3], %s246
        %s248 = sand.u32 %s32, 1
        %s249 = smul.addr %s248, 128
        %s250 = scalar_lea.vmem [#allocation2], %s249
        // Predicated region
        $region41: #{tpu_custom_call.1} parent=39 // pred_check
          %p251 = pneg %p45
        $region42: #{tpu_custom_call.1} parent=39 // pred_check_branch
          %253 = sbr.rel (%p251) target = $region44
        $region43: #{tpu_custom_call.1} parent=39 // pred_region
          %255 = dma.done %s247, 2048
        $region44: #{tpu_custom_call.1} parent=39 // pred_fallthru
          _
        // Predicated region
        $region45: #{tpu_custom_call.1} parent=39 // pred_check
          %p256 = pneg %p66
        $region46: #{tpu_custom_call.1} parent=39 // pred_check_branch
          %258 = sbr.rel (%p256) target = $region48
        $region47: #{tpu_custom_call.1} parent=39 // pred_region
          %260 = dma.done [#allocation6], 4096
        $region48: #{tpu_custom_call.1} parent=39 // pred_fallthru
          _
        // Predicated region
        $region49: #{tpu_custom_call.1} parent=39 // pred_check
          %p261 = pneg %p87
        $region50: #{tpu_custom_call.1} parent=39 // pred_check_branch
          %263 = sbr.rel (%p261) target = $region52
        $region51: #{tpu_custom_call.1} parent=39 // pred_region
          %265 = dma.done [#allocation6], 32
        $region52: #{tpu_custom_call.1} parent=39 // pred_fallthru
          _
        // Predicated region
        $region53: #{tpu_custom_call.1} parent=39 // pred_check
          %p266 = pneg %p108
        $region54: #{tpu_custom_call.1} parent=39 // pred_check_branch
          %268 = sbr.rel (%p266) target = $region56
        $region55: #{tpu_custom_call.1} parent=39 // pred_region
          %270 = dma.done [#allocation9], 4096
        $region56: #{tpu_custom_call.1} parent=39 // pred_fallthru
          _
        %s271 = sand.u32 %s32, 1
        %s272 = scalar_lea.sflag [#allocation3], %s271
        %s273 = sand.u32 %s32, 1
        %s274 = smul.addr %s273, 128
        %s275 = scalar_lea.vmem [#allocation2], %s274
        %p276 = pneg %p45
        %p277 = pneg %p42
        %p278 = pneg %p66
        %p279 = pneg %p63
        %p280 = pneg %p87
        %p281 = pneg %p84
        %p282 = pneg %p108
        %p283 = pneg %p105
        %p284 = pneg %p129
        %p285 = pneg %p126
        %p286 = pneg %p155
        %p287 = pneg %p152
        %s288 = sand.u32 %s142, 1
        %s289 = scalar_lea.sflag [#allocation4], %s288
        %s290 = sand.u32 %s142, 1
        %s291 = smul.addr %s290, 128
        %s292 = scalar_lea.vmem [#allocation10], %s291
        %s293 = smul.u32 16, %s24
        %s294 = smul.u32 16, %s24
        %v295 = vld [vmem:[%s250] sm:$0xff]
        %v296 = vld [vmem:[%s250 + $0x8] sm:$0xff]
        %v297 = vld [vmem:[%s250 + $0x10] sm:$0xff]
        %v298 = vld [vmem:[%s250 + $0x18] sm:$0xff]
        %v299 = vld [vmem:[%s250 + $0x20] sm:$0xff]
        %v300 = vld [vmem:[%s250 + $0x28] sm:$0xff]
        %v301 = vld [vmem:[%s250 + $0x30] sm:$0xff]
        %v302 = vld [vmem:[%s250 + $0x38] sm:$0xff]
        %v303 = vld [vmem:[%s250 + $0x40] sm:$0xff]
        %v304 = vld [vmem:[%s250 + $0x48] sm:$0xff]
        %v305 = vld [vmem:[%s250 + $0x50] sm:$0xff]
        %v306 = vld [vmem:[%s250 + $0x58] sm:$0xff]
        %v307 = vld [vmem:[%s250 + $0x60] sm:$0xff]
        %v308 = vld [vmem:[%s250 + $0x68] sm:$0xff]
        %v309 = vld [vmem:[%s250 + $0x70] sm:$0xff]
        %v310 = vld [vmem:[%s250 + $0x78] sm:$0xff]
        %v311 = vld [vmem:[#allocation5] sm:$0xff]
        %v312 = vld [vmem:[#allocation5 + $0x8] sm:$0xff]
        %v313 = vld [vmem:[#allocation5 + $0x10] sm:$0xff]
        %v314 = vld [vmem:[#allocation5 + $0x18] sm:$0xff]
        %v315 = vld [vmem:[#allocation5 + $0x20] sm:$0xff]
        %v316 = vld [vmem:[#allocation5 + $0x28] sm:$0xff]
        %v317 = vld [vmem:[#allocation5 + $0x30] sm:$0xff]
        %v318 = vld [vmem:[#allocation5 + $0x38] sm:$0xff]
        %v319 = vld [vmem:[#allocation5 + $0x40] sm:$0xff]
        %v320 = vld [vmem:[#allocation5 + $0x48] sm:$0xff]
        %v321 = vld [vmem:[#allocation5 + $0x50] sm:$0xff]
        %v322 = vld [vmem:[#allocation5 + $0x58] sm:$0xff]
        %v323 = vld [vmem:[#allocation5 + $0x60] sm:$0xff]
        %v324 = vld [vmem:[#allocation5 + $0x68] sm:$0xff]
        %v325 = vld [vmem:[#allocation5 + $0x70] sm:$0xff]
        %v326 = vld [vmem:[#allocation5 + $0x78] sm:$0xff]
        %v327 = vld [vmem:[#allocation5 + $0x80] sm:$0xff]
        %v328 = vld [vmem:[#allocation5 + $0x88] sm:$0xff]
        %v329 = vld [vmem:[#allocation5 + $0x90] sm:$0xff]
        %v330 = vld [vmem:[#allocation5 + $0x98] sm:$0xff]
        %v331 = vld [vmem:[#allocation5 + $0xa0] sm:$0xff]
        %v332 = vld [vmem:[#allocation5 + $0xa8] sm:$0xff]
        %v333 = vld [vmem:[#allocation5 + $0xb0] sm:$0xff]
        %v334 = vld [vmem:[#allocation5 + $0xb8] sm:$0xff]
        %v335 = vld [vmem:[#allocation5 + $0xc0] sm:$0xff]
        %v336 = vld [vmem:[#allocation5 + $0xc8] sm:$0xff]
        %v337 = vld [vmem:[#allocation5 + $0xd0] sm:$0xff]
        %v338 = vld [vmem:[#allocation5 + $0xd8] sm:$0xff]
        %v339 = vld [vmem:[#allocation5 + $0xe0] sm:$0xff]
        %v340 = vld [vmem:[#allocation5 + $0xe8] sm:$0xff]
        %v341 = vld [vmem:[#allocation5 + $0xf0] sm:$0xff]
        %v342 = vld [vmem:[#allocation5 + $0xf8] sm:$0xff]
        %v343 = vld [vmem:[#allocation7] sm:$0x3]
        %v345 = vperm.slane %v343, 0
        %v346 = vperm.slane %v343, 1
        %349 = vmatpush.msra.mxu0 %v341
        %350 = vmatpush.msra.mxu0 %v339
        %351 = vmatpush.msra.mxu0 %v337
        %352 = vmatpush.msra.mxu0 %v335
        %353 = vmatpush.msra.mxu0 %v333
        %354 = vmatpush.msra.mxu0 %v331
        %355 = vmatpush.msra.mxu0 %v329
        %356 = vmatpush.msra.mxu0 %v327
        %357 = vmatpush.msra.mxu0 %v325
        %358 = vmatpush.msra.mxu0 %v323
        %359 = vmatpush.msra.mxu0 %v321
        %360 = vmatpush.msra.mxu0 %v319
        %361 = vmatpush.msra.mxu0 %v317
        %362 = vmatpush.msra.mxu0 %v315
        %363 = vmatpush.msra.mxu0 %v313
        %364 = vmatpush.msra.mxu0 %v311
        %365 = vmatmul.f32.gmra.mxu0 %v295
        %v366 = vpop.f32.mrf.mxu0
        %v367 = vadd.f32 %v345, %v366
        %368 = vmatmul.f32.gmra.mxu0 %v296
        %v369 = vpop.f32.mrf.mxu0
        %v370 = vadd.f32 %v345, %v369
        %371 = vmatmul.f32.gmra.mxu0 %v297
        %v372 = vpop.f32.mrf.mxu0
        %v373 = vadd.f32 %v345, %v372
        %374 = vmatmul.f32.gmra.mxu0 %v298
        %v375 = vpop.f32.mrf.mxu0
        %v376 = vadd.f32 %v345, %v375
        %377 = vmatmul.f32.gmra.mxu0 %v299
        %v378 = vpop.f32.mrf.mxu0
        %v379 = vadd.f32 %v345, %v378
        %380 = vmatmul.f32.gmra.mxu0 %v300
        %v381 = vpop.f32.mrf.mxu0
        %v382 = vadd.f32 %v345, %v381
        %383 = vmatmul.f32.gmra.mxu0 %v301
        %v384 = vpop.f32.mrf.mxu0
        %v385 = vadd.f32 %v345, %v384
        %386 = vmatmul.f32.gmra.mxu0 %v302
        %v387 = vpop.f32.mrf.mxu0
        %v388 = vadd.f32 %v345, %v387
        %389 = vmatmul.f32.gmra.mxu0 %v303
        %v390 = vpop.f32.mrf.mxu0
        %v391 = vadd.f32 %v345, %v390
        %392 = vmatmul.f32.gmra.mxu0 %v304
        %v393 = vpop.f32.mrf.mxu0
        %v394 = vadd.f32 %v345, %v393
        %395 = vmatmul.f32.gmra.mxu0 %v305
        %v396 = vpop.f32.mrf.mxu0
        %v397 = vadd.f32 %v345, %v396
        %398 = vmatmul.f32.gmra.mxu0 %v306
        %v399 = vpop.f32.mrf.mxu0
        %v400 = vadd.f32 %v345, %v399
        %401 = vmatmul.f32.gmra.mxu0 %v307
        %v402 = vpop.f32.mrf.mxu0
        %v403 = vadd.f32 %v345, %v402
        %404 = vmatmul.f32.gmra.mxu0 %v308
        %v405 = vpop.f32.mrf.mxu0
        %v406 = vadd.f32 %v345, %v405
        %407 = vmatmul.f32.gmra.mxu0 %v309
        %v408 = vpop.f32.mrf.mxu0
        %v409 = vadd.f32 %v345, %v408
        %410 = vmatmul.f32.gmra.mxu0 %v310
        %v411 = vpop.f32.mrf.mxu0
        %v412 = vadd.f32 %v345, %v411
        %413 = vdwg.mxu0
        %414 = vmatpush.msra.mxu0 %v342
        %415 = vmatpush.msra.mxu0 %v340
        %416 = vmatpush.msra.mxu0 %v338
        %417 = vmatpush.msra.mxu0 %v336
        %418 = vmatpush.msra.mxu0 %v334
        %419 = vmatpush.msra.mxu0 %v332
        %420 = vmatpush.msra.mxu0 %v330
        %421 = vmatpush.msra.mxu0 %v328
        %422 = vmatpush.msra.mxu0 %v326
        %423 = vmatpush.msra.mxu0 %v324
        %424 = vmatpush.msra.mxu0 %v322
        %425 = vmatpush.msra.mxu0 %v320
        %426 = vmatpush.msra.mxu0 %v318
        %427 = vmatpush.msra.mxu0 %v316
        %428 = vmatpush.msra.mxu0 %v314
        %429 = vmatpush.msra.mxu0 %v312
        %430 = vmatmul.f32.gmra.mxu0 %v295
        %v431 = vpop.f32.mrf.mxu0
        %v432 = vadd.f32 %v346, %v431
        %433 = vmatmul.f32.gmra.mxu0 %v296
        %v434 = vpop.f32.mrf.mxu0
        %v435 = vadd.f32 %v346, %v434
        %436 = vmatmul.f32.gmra.mxu0 %v297
        %v437 = vpop.f32.mrf.mxu0
        %v438 = vadd.f32 %v346, %v437
        %439 = vmatmul.f32.gmra.mxu0 %v298
        %v440 = vpop.f32.mrf.mxu0
        %v441 = vadd.f32 %v346, %v440
        %442 = vmatmul.f32.gmra.mxu0 %v299
        %v443 = vpop.f32.mrf.mxu0
        %v444 = vadd.f32 %v346, %v443
        %445 = vmatmul.f32.gmra.mxu0 %v300
        %v446 = vpop.f32.mrf.mxu0
        %v447 = vadd.f32 %v346, %v446
        %448 = vmatmul.f32.gmra.mxu0 %v301
        %v449 = vpop.f32.mrf.mxu0
        %v450 = vadd.f32 %v346, %v449
        %451 = vmatmul.f32.gmra.mxu0 %v302
        %v452 = vpop.f32.mrf.mxu0
        %v453 = vadd.f32 %v346, %v452
        %454 = vmatmul.f32.gmra.mxu0 %v303
        %v455 = vpop.f32.mrf.mxu0
        %v456 = vadd.f32 %v346, %v455
        %457 = vmatmul.f32.gmra.mxu0 %v304
        %v458 = vpop.f32.mrf.mxu0
        %v459 = vadd.f32 %v346, %v458
        %460 = vmatmul.f32.gmra.mxu0 %v305
        %v461 = vpop.f32.mrf.mxu0
        %v462 = vadd.f32 %v346, %v461
        %463 = vmatmul.f32.gmra.mxu0 %v306
        %v464 = vpop.f32.mrf.mxu0
        %v465 = vadd.f32 %v346, %v464
        %466 = vmatmul.f32.gmra.mxu0 %v307
        %v467 = vpop.f32.mrf.mxu0
        %v468 = vadd.f32 %v346, %v467
        %469 = vmatmul.f32.gmra.mxu0 %v308
        %v470 = vpop.f32.mrf.mxu0
        %v471 = vadd.f32 %v346, %v470
        %472 = vmatmul.f32.gmra.mxu0 %v309
        %v473 = vpop.f32.mrf.mxu0
        %v474 = vadd.f32 %v346, %v473
        %475 = vmatmul.f32.gmra.mxu0 %v310
        %v476 = vpop.f32.mrf.mxu0
        %v477 = vadd.f32 %v346, %v476
        %478 = vdwg.mxu0
        %v479 = vmax.f32 %v367, 0.0
        %v480 = vmax.f32 %v432, 0.0
        %v481 = vmax.f32 %v370, 0.0
        %v482 = vmax.f32 %v435, 0.0
        %v483 = vmax.f32 %v373, 0.0
        %v484 = vmax.f32 %v438, 0.0
        %v485 = vmax.f32 %v376, 0.0
        %v486 = vmax.f32 %v441, 0.0
        %v487 = vmax.f32 %v379, 0.0
        %v488 = vmax.f32 %v444, 0.0
        %v489 = vmax.f32 %v382, 0.0
        %v490 = vmax.f32 %v447, 0.0
        %v491 = vmax.f32 %v385, 0.0
        %v492 = vmax.f32 %v450, 0.0
        %v493 = vmax.f32 %v388, 0.0
        %v494 = vmax.f32 %v453, 0.0
        %v495 = vmax.f32 %v391, 0.0
        %v496 = vmax.f32 %v456, 0.0
        %v497 = vmax.f32 %v394, 0.0
        %v498 = vmax.f32 %v459, 0.0
        %v499 = vmax.f32 %v397, 0.0
        %v500 = vmax.f32 %v462, 0.0
        %v501 = vmax.f32 %v400, 0.0
        %v502 = vmax.f32 %v465, 0.0
        %v503 = vmax.f32 %v403, 0.0
        %v504 = vmax.f32 %v468, 0.0
        %v505 = vmax.f32 %v406, 0.0
        %v506 = vmax.f32 %v471, 0.0
        %v507 = vmax.f32 %v409, 0.0
        %v508 = vmax.f32 %v474, 0.0
        %v509 = vmax.f32 %v412, 0.0
        %v510 = vmax.f32 %v477, 0.0
        %v511 = vld [vmem:[#allocation8] sm:$0xff]
        %v512 = vld [vmem:[#allocation8 + $0x8] sm:$0xff]
        %v513 = vld [vmem:[#allocation8 + $0x10] sm:$0xff]
        %v514 = vld [vmem:[#allocation8 + $0x18] sm:$0xff]
        %v515 = vld [vmem:[#allocation8 + $0x20] sm:$0xff]
        %v516 = vld [vmem:[#allocation8 + $0x28] sm:$0xff]
        %v517 = vld [vmem:[#allocation8 + $0x30] sm:$0xff]
        %v518 = vld [vmem:[#allocation8 + $0x38] sm:$0xff]
        %v519 = vld [vmem:[#allocation8 + $0x40] sm:$0xff]
        %v520 = vld [vmem:[#allocation8 + $0x48] sm:$0xff]
        %v521 = vld [vmem:[#allocation8 + $0x50] sm:$0xff]
        %v522 = vld [vmem:[#allocation8 + $0x58] sm:$0xff]
        %v523 = vld [vmem:[#allocation8 + $0x60] sm:$0xff]
        %v524 = vld [vmem:[#allocation8 + $0x68] sm:$0xff]
        %v525 = vld [vmem:[#allocation8 + $0x70] sm:$0xff]
        %v526 = vld [vmem:[#allocation8 + $0x78] sm:$0xff]
        %v527 = vld [vmem:[#allocation8 + $0x80] sm:$0xff]
        %v528 = vld [vmem:[#allocation8 + $0x88] sm:$0xff]
        %v529 = vld [vmem:[#allocation8 + $0x90] sm:$0xff]
        %v530 = vld [vmem:[#allocation8 + $0x98] sm:$0xff]
        %v531 = vld [vmem:[#allocation8 + $0xa0] sm:$0xff]
        %v532 = vld [vmem:[#allocation8 + $0xa8] sm:$0xff]
        %v533 = vld [vmem:[#allocation8 + $0xb0] sm:$0xff]
        %v534 = vld [vmem:[#allocation8 + $0xb8] sm:$0xff]
        %v535 = vld [vmem:[#allocation8 + $0xc0] sm:$0xff]
        %v536 = vld [vmem:[#allocation8 + $0xc8] sm:$0xff]
        %v537 = vld [vmem:[#allocation8 + $0xd0] sm:$0xff]
        %v538 = vld [vmem:[#allocation8 + $0xd8] sm:$0xff]
        %v539 = vld [vmem:[#allocation8 + $0xe0] sm:$0xff]
        %v540 = vld [vmem:[#allocation8 + $0xe8] sm:$0xff]
        %v541 = vld [vmem:[#allocation8 + $0xf0] sm:$0xff]
        %v542 = vld [vmem:[#allocation8 + $0xf8] sm:$0xff]
        %v543 = vld [vmem:[%s4] sm:$0x1]
        %v545 = vperm.slane %v543, 0
        %547 = vmatpush.msra.mxu0 %v526
        %548 = vmatpush.msra.mxu0 %v525
        %549 = vmatpush.msra.mxu0 %v524
        %550 = vmatpush.msra.mxu0 %v523
        %551 = vmatpush.msra.mxu0 %v522
        %552 = vmatpush.msra.mxu0 %v521
        %553 = vmatpush.msra.mxu0 %v520
        %554 = vmatpush.msra.mxu0 %v519
        %555 = vmatpush.msra.mxu0 %v518
        %556 = vmatpush.msra.mxu0 %v517
        %557 = vmatpush.msra.mxu0 %v516
        %558 = vmatpush.msra.mxu0 %v515
        %559 = vmatpush.msra.mxu0 %v514
        %560 = vmatpush.msra.mxu0 %v513
        %561 = vmatpush.msra.mxu0 %v512
        %562 = vmatpush.msra.mxu0 %v511
        %563 = vmatmul.f32.gmra.mxu0 %v479
        %v564 = vpop.f32.mrf.mxu0
        %v565 = vadd.f32 %v545, %v564
        %566 = vmatmul.f32.gmra.mxu0 %v481
        %v567 = vpop.f32.mrf.mxu0
        %v568 = vadd.f32 %v545, %v567
        %569 = vmatmul.f32.gmra.mxu0 %v483
        %v570 = vpop.f32.mrf.mxu0
        %v571 = vadd.f32 %v545, %v570
        %572 = vmatmul.f32.gmra.mxu0 %v485
        %v573 = vpop.f32.mrf.mxu0
        %v574 = vadd.f32 %v545, %v573
        %575 = vmatmul.f32.gmra.mxu0 %v487
        %v576 = vpop.f32.mrf.mxu0
        %v577 = vadd.f32 %v545, %v576
        %578 = vmatmul.f32.gmra.mxu0 %v489
        %v579 = vpop.f32.mrf.mxu0
        %v580 = vadd.f32 %v545, %v579
        %581 = vmatmul.f32.gmra.mxu0 %v491
        %v582 = vpop.f32.mrf.mxu0
        %v583 = vadd.f32 %v545, %v582
        %584 = vmatmul.f32.gmra.mxu0 %v493
        %v585 = vpop.f32.mrf.mxu0
        %v586 = vadd.f32 %v545, %v585
        %587 = vmatmul.f32.gmra.mxu0 %v495
        %v588 = vpop.f32.mrf.mxu0
        %v589 = vadd.f32 %v545, %v588
        %590 = vmatmul.f32.gmra.mxu0 %v497
        %v591 = vpop.f32.mrf.mxu0
        %v592 = vadd.f32 %v545, %v591
        %593 = vmatmul.f32.gmra.mxu0 %v499
        %v594 = vpop.f32.mrf.mxu0
        %v595 = vadd.f32 %v545, %v594
        %596 = vmatmul.f32.gmra.mxu0 %v501
        %v597 = vpop.f32.mrf.mxu0
        %v598 = vadd.f32 %v545, %v597
        %599 = vmatmul.f32.gmra.mxu0 %v503
        %v600 = vpop.f32.mrf.mxu0
        %v601 = vadd.f32 %v545, %v600
        %602 = vmatmul.f32.gmra.mxu0 %v505
        %v603 = vpop.f32.mrf.mxu0
        %v604 = vadd.f32 %v545, %v603
        %605 = vmatmul.f32.gmra.mxu0 %v507
        %v606 = vpop.f32.mrf.mxu0
        %v607 = vadd.f32 %v545, %v606
        %608 = vmatmul.f32.gmra.mxu0 %v509
        %v609 = vpop.f32.mrf.mxu0
        %v610 = vadd.f32 %v545, %v609
        %611 = vdwg.mxu0
        %612 = vmatpush.msra.mxu0 %v542
        %613 = vmatpush.msra.mxu0 %v541
        %614 = vmatpush.msra.mxu0 %v540
        %615 = vmatpush.msra.mxu0 %v539
        %616 = vmatpush.msra.mxu0 %v538
        %617 = vmatpush.msra.mxu0 %v537
        %618 = vmatpush.msra.mxu0 %v536
        %619 = vmatpush.msra.mxu0 %v535
        %620 = vmatpush.msra.mxu0 %v534
        %621 = vmatpush.msra.mxu0 %v533
        %622 = vmatpush.msra.mxu0 %v532
        %623 = vmatpush.msra.mxu0 %v531
        %624 = vmatpush.msra.mxu0 %v530
        %625 = vmatpush.msra.mxu0 %v529
        %626 = vmatpush.msra.mxu0 %v528
        %627 = vmatpush.msra.mxu0 %v527
        %628 = vmatmul.f32.gmra.mxu0 %v480
        %v629 = vpop.f32.mrf.mxu0
        %v630 = vadd.f32 %v565, %v629
        %631 = vmatmul.f32.gmra.mxu0 %v482
        %v632 = vpop.f32.mrf.mxu0
        %v633 = vadd.f32 %v568, %v632
        %634 = vmatmul.f32.gmra.mxu0 %v484
        %v635 = vpop.f32.mrf.mxu0
        %v636 = vadd.f32 %v571, %v635
        %637 = vmatmul.f32.gmra.mxu0 %v486
        %v638 = vpop.f32.mrf.mxu0
        %v639 = vadd.f32 %v574, %v638
        %640 = vmatmul.f32.gmra.mxu0 %v488
        %v641 = vpop.f32.mrf.mxu0
        %v642 = vadd.f32 %v577, %v641
        %643 = vmatmul.f32.gmra.mxu0 %v490
        %v644 = vpop.f32.mrf.mxu0
        %v645 = vadd.f32 %v580, %v644
        %646 = vmatmul.f32.gmra.mxu0 %v492
        %v647 = vpop.f32.mrf.mxu0
        %v648 = vadd.f32 %v583, %v647
        %649 = vmatmul.f32.gmra.mxu0 %v494
        %v650 = vpop.f32.mrf.mxu0
        %v651 = vadd.f32 %v586, %v650
        %652 = vmatmul.f32.gmra.mxu0 %v496
        %v653 = vpop.f32.mrf.mxu0
        %v654 = vadd.f32 %v589, %v653
        %655 = vmatmul.f32.gmra.mxu0 %v498
        %v656 = vpop.f32.mrf.mxu0
        %v657 = vadd.f32 %v592, %v656
        %658 = vmatmul.f32.gmra.mxu0 %v500
        %v659 = vpop.f32.mrf.mxu0
        %v660 = vadd.f32 %v595, %v659
        %661 = vmatmul.f32.gmra.mxu0 %v502
        %v662 = vpop.f32.mrf.mxu0
        %v663 = vadd.f32 %v598, %v662
        %664 = vmatmul.f32.gmra.mxu0 %v504
        %v665 = vpop.f32.mrf.mxu0
        %v666 = vadd.f32 %v601, %v665
        %667 = vmatmul.f32.gmra.mxu0 %v506
        %v668 = vpop.f32.mrf.mxu0
        %v669 = vadd.f32 %v604, %v668
        %670 = vmatmul.f32.gmra.mxu0 %v508
        %v671 = vpop.f32.mrf.mxu0
        %v672 = vadd.f32 %v607, %v671
        %673 = vmatmul.f32.gmra.mxu0 %v510
        %v674 = vpop.f32.mrf.mxu0
        %v675 = vadd.f32 %v610, %v674
        %676 = vdwg.mxu0
        %677 = vst [vmem:[%s292] sm:$0xff] %v630
        %678 = vst [vmem:[%s292 + $0x8] sm:$0xff] %v633
        %679 = vst [vmem:[%s292 + $0x10] sm:$0xff] %v636
        %680 = vst [vmem:[%s292 + $0x18] sm:$0xff] %v639
        %681 = vst [vmem:[%s292 + $0x20] sm:$0xff] %v642
        %682 = vst [vmem:[%s292 + $0x28] sm:$0xff] %v645
        %683 = vst [vmem:[%s292 + $0x30] sm:$0xff] %v648
        %684 = vst [vmem:[%s292 + $0x38] sm:$0xff] %v651
        %685 = vst [vmem:[%s292 + $0x40] sm:$0xff] %v654
        %686 = vst [vmem:[%s292 + $0x48] sm:$0xff] %v657
        %687 = vst [vmem:[%s292 + $0x50] sm:$0xff] %v660
        %688 = vst [vmem:[%s292 + $0x58] sm:$0xff] %v663
        %689 = vst [vmem:[%s292 + $0x60] sm:$0xff] %v666
        %690 = vst [vmem:[%s292 + $0x68] sm:$0xff] %v669
        %691 = vst [vmem:[%s292 + $0x70] sm:$0xff] %v672
        %692 = vst [vmem:[%s292 + $0x78] sm:$0xff] %v675
        %s693 = sand.u32 %s142, 1
        %s694 = scalar_lea.sflag [#allocation4], %s693
        %s695 = sand.u32 %s142, 1
        %s696 = smul.addr %s695, 128
        %s697 = scalar_lea.vmem [#allocation10], %s696
        // Predicated region
        $region57: #{tpu_custom_call.1} parent=39 // pred_check
          %p698 = pneg %p152
        $region58: #{tpu_custom_call.1} parent=39 // pred_check_branch
          %700 = sbr.rel (%p698) target = $region60
        $region59: #{tpu_custom_call.1} parent=39 // pred_region
          %s701 = smul.u32 16, %s24
          %703 = vsyncadd %s694, 0
          %s704 = smul.addr %s701, 8
          %s705 = scalar_lea.hbm %s5, %s704
          %s706 = sshll.u32 %s697, 4
          %s707 = int_to_ptr.vmem [resolvable:$true] %s706
          %s708 = sshll.u32 %s705, 4
          %s709 = int_to_ptr.hbm [resolvable:$true] %s708
          %714 = dma.vmem_to_hbm [thread:$0]  %s707, 2048, %s709, %s694, 128, 128, 8
        $region60: #{tpu_custom_call.1} parent=39 // pred_fallthru
          _
      $region40: #{tpu_custom_call.1} parent=5 // pred_fallthru
        _
      %p715 = scmp.le.s32.totalorder 2, %s19
      // Predicated region
      $region61: #{tpu_custom_call.1} parent=5 // pred_check
        %p716 = pneg %p715
      $region62: #{tpu_custom_call.1} parent=5 // pred_check_branch
        %718 = sbr.rel (%p716) target = $region64
      $region63: #{tpu_custom_call.1} parent=5 // pred_region
        %s719 = ssub.s32 %s19, 2
        // Predicated region
        $region65: #{tpu_custom_call.1} parent=63 // pred_check
          %p720 = pneg %p158
        $region66: #{tpu_custom_call.1} parent=63 // pred_check_branch
          %722 = sbr.rel (%p720) target = $region68
        $region67: #{tpu_custom_call.1} parent=63 // pred_region
          %s723 = sand.u32 %s143, 1
          %s724 = scalar_lea.sflag [#allocation4], %s723
          %s725 = sand.u32 %s143, 1
          %s726 = smul.addr %s725, 128
          %s727 = scalar_lea.vmem [#allocation10], %s726
          %729 = dma.done %s724, 2048
        $region68: #{tpu_custom_call.1} parent=63 // pred_fallthru
          _
      $region64: #{tpu_custom_call.1} parent=5 // pred_fallthru
        _
    $region6: #{tpu_custom_call.1} parent=1 // loop_footer
      %s23 = sadd.s32 1, %s19
    $region7: #{tpu_custom_call.1} parent=1 // loop_footer_branch
      %18 = sbr.rel target = $region3
    $region8: #{tpu_custom_call.1} parent=1 // loop_exit
      _
    %730 = vsyncpa [#allocation3], 1
    %s731 = scalar_lea.sflag [#allocation3], 1
    %732 = vsyncpa %s731, 1
    %733 = vsyncpa [#allocation6], 1
    %734 = vsyncpa [#allocation9], 1
    %735 = vsyncpa [#allocation4], 1
    %s736 = scalar_lea.sflag [#allocation4], 1
    %737 = vsyncpa %s736, 1

</llo_original>
